<compile_context>
chip_gen: v7x
topology: tpu7x:2x2x1
jax: 0.10.0
libtpu: 0.0.40
codegen_flags: <defaults>
</compile_context>

<pallas_src>
import jax
import jax.numpy as jnp
from jax.experimental import pallas as pl
from jax.experimental.pallas import tpu as pltpu

M, K, N = 8, 25, 50  # x1:(M,K)  x2:(K,N)  W:(N,N)  b:(N,)  out:(M,2N)


def _fused_kernel(x1_ref, x2_ref, wt_ref, b_ref, out_ref):
    # v1 = x1 @ x2   (MXU, f32 accumulation)
    v1 = jnp.dot(x1_ref[...], x2_ref[...], preferred_element_type=jnp.float32)
    # v2 = v1 @ W.T + b  (PyTorch Linear). wt_ref already holds W.T, so this is
    # a plain K-major matmul — no transpose on the dependent chain.
    v2 = jnp.dot(v1, wt_ref[...], preferred_element_type=jnp.float32) + b_ref[...]
    # Fused concat: build the (M, 2N) row in-register, one store.
    out_ref[...] = jnp.concatenate([v1, v2], axis=-1).astype(out_ref.dtype)


def fused_matmul_addmm_cat(x1, x2, w, b):
    """Computes cat([x1@x2, (x1@x2)@w.T + b], axis=1) in one Pallas kernel."""
    w_t = jnp.transpose(w)      # one-time (50,50) transpose outside the kernel
    b2d = b.reshape(1, N)       # keep VMEM operands 2-D
    vmem = pl.BlockSpec(memory_space=pltpu.MemorySpace.VMEM)  # full-array, gridless
    return pl.pallas_call(
        _fused_kernel,
        out_shape=jax.ShapeDtypeStruct((M, 2 * N), jnp.float32),
        in_specs=[vmem, vmem, vmem, vmem],
        out_specs=vmem,
    )(x1, x2, w_t, b2d)


if __name__ == "__main__":
    key = jax.random.PRNGKey(0)
    k1, k2, k3, k4 = jax.random.split(key, 4)

    # deterministic inputs / parameters
    x1 = jax.random.normal(k1, (M, K), dtype=jnp.float32)
    x2 = jax.random.normal(k2, (K, N), dtype=jnp.float32)
    # Linear(50, 50) parameters, PyTorch-style uniform(-1/sqrt(fan_in), 1/sqrt(fan_in))
    bound = 1.0 / jnp.sqrt(jnp.float32(N))
    w = jax.random.uniform(k3, (N, N), dtype=jnp.float32, minval=-bound, maxval=bound)
    b = jax.random.uniform(k4, (N,), dtype=jnp.float32, minval=-bound, maxval=bound)

    out = jax.block_until_ready(fused_matmul_addmm_cat(x1, x2, w, b))

    # reference check in plain JAX
    v1_ref = x1 @ x2
    v2_ref = v1_ref @ w.T + b
    ref = jnp.concatenate([v1_ref, v2_ref], axis=1)
    assert out.shape == (M, 2 * N)
    assert jnp.allclose(out, ref, atol=1e-4, rtol=1e-4), "mismatch vs reference"

    print("KERNEL_OK")
</pallas_src>

<mosaic_0001>
module attributes {stable_mosaic.version = 11 : i64} {
  func.func @_fused_kernel(%arg0: memref<8x25xf32, #tpu.memory_space<vmem>>, %arg1: memref<25x50xf32, #tpu.memory_space<vmem>>, %arg2: memref<50x50xf32, #tpu.memory_space<vmem>>, %arg3: memref<1x50xf32, #tpu.memory_space<vmem>>, %arg4: memref<8x100xf32, #tpu.memory_space<vmem>>) attributes {dimension_semantics = [], scalar_prefetch = 0 : i64, scratch_operands = 0 : i64, tpu.core_type = #tpu.core_type<tc>} {
    %c0 = arith.constant 0 : index
    %c0_0 = arith.constant 0 : index
    %0 = vector.load %arg0[%c0, %c0_0] : memref<8x25xf32, #tpu.memory_space<vmem>>, vector<8x25xf32>
    %c0_1 = arith.constant 0 : index
    %c0_2 = arith.constant 0 : index
    %1 = vector.load %arg1[%c0_1, %c0_2] : memref<25x50xf32, #tpu.memory_space<vmem>>, vector<25x50xf32>
    %cst = arith.constant dense<0.000000e+00> : vector<8x50xf32>
    %2 = tpu.matmul %0, %1, %cst {dimension_numbers = #tpu.dot_dimension_numbers<[1], [0], [0], [1], [0, 0, 1, 1], [], []>} : vector<8x25xf32>, vector<25x50xf32>, vector<8x50xf32> -> vector<8x50xf32>
    %c0_3 = arith.constant 0 : index
    %c0_4 = arith.constant 0 : index
    %3 = vector.load %arg2[%c0_3, %c0_4] : memref<50x50xf32, #tpu.memory_space<vmem>>, vector<50x50xf32>
    %cst_5 = arith.constant dense<0.000000e+00> : vector<8x50xf32>
    %4 = tpu.matmul %2, %3, %cst_5 {dimension_numbers = #tpu.dot_dimension_numbers<[1], [0], [0], [1], [0, 0, 1, 1], [], []>} : vector<8x50xf32>, vector<50x50xf32>, vector<8x50xf32> -> vector<8x50xf32>
    %c0_6 = arith.constant 0 : index
    %c0_7 = arith.constant 0 : index
    %5 = vector.load %arg3[%c0_6, %c0_7] : memref<1x50xf32, #tpu.memory_space<vmem>>, vector<1x50xf32>
    %6 = vector.broadcast %5 : vector<1x50xf32> to vector<8x50xf32>
    %7 = arith.addf %4, %6 : vector<8x50xf32>
    %8 = tpu.concatenate %2, %7 in 1 : vector<8x50xf32>, vector<8x50xf32> -> vector<8x100xf32>
    %c0_8 = arith.constant 0 : index
    %c0_9 = arith.constant 0 : index
    %9 = vector.load %arg4[%c0_8, %c0_9] : memref<8x100xf32, #tpu.memory_space<vmem>>, vector<8x100xf32>
    tpu.vector_store %arg4[%c0_8, %c0_9], %8 {strides = array<i32>} : memref<8x100xf32, #tpu.memory_space<vmem>>, vector<8x100xf32>,
    return
  }
}

</mosaic_0001>

<llo_original>
// kernel: tpu_custom_call.1
$region0: #{tpu_custom_call.1}
  #allocation0 [shape = 'u32[]', space=smem, size = 0x4, offset = 0x4, fixed_abs, tag = 'smem constant byte address 0x4 - core index']
  #allocation1 [shape = 'u32[144,128]{1,0:T(1,128)}', space=vmem, size = 0x12000, scoped, tag = 'internal scratch']
  %s0 = inlined_call_operand.hbm [shape: f32[8,25], index: 0, kind: input, shape index: {}]
  %s1 = inlined_call_operand.hbm [shape: f32[25,50], index: 1, kind: input, shape index: {}]
  %s2 = inlined_call_operand.hbm [shape: f32[50,50], index: 2, kind: input, shape index: {}]
  %s3 = inlined_call_operand.vmem [shape: f32[1,50], index: 3, kind: input, shape index: {}]
  %s4 = inlined_call_operand.hbm [shape: f32[8,100], index: 4, kind: output, shape index: {}]
  %s5 = sld [smem:[#allocation0]]
  $region38: #{tpu_custom_call.1} parent=0
    _
  %s7 = ssub.s32 1, %s5
  %s8 = scalar_select 0, %s7, %s5
  $region1: #{tpu_custom_call.1} parent=0
    #allocation2 [shape = 'u8[4096]{0}', space=vmem, size = 0x1000, scoped, tag = 'input window, operand 0, single buffered']
    #allocation3 [shape = 's32[1]{0}', space=sflag, size = 0x4, scoped, tag = 'scoped memory for tpu_custom_call.1']
    #allocation4 [shape = 's32[1]{0}', space=sflag, size = 0x4, scoped, tag = 'scoped memory for tpu_custom_call.1']
    #allocation5 [shape = 'u8[16384]{0}', space=vmem, size = 0x4000, scoped, tag = 'input window, operand 1, single buffered']
    #allocation6 [shape = 's32[1]{0}', space=sflag, size = 0x4, scoped, tag = 'scoped memory for tpu_custom_call.1']
    #allocation7 [shape = 'u8[28672]{0}', space=vmem, size = 0x7000, scoped, tag = 'input window, operand 2, single buffered']
    #allocation8 [shape = 'u8[4096]{0}', space=vmem, size = 0x1000, scoped, tag = 'output window, operand 0, single buffered']
    %9 = vsyncpa [#allocation3], 0
    %10 = vsyncpa [#allocation6], 0
    %11 = vsyncpa [#allocation4], 0
    // Predicated region
    $region2: #{tpu_custom_call.1} parent=1 // pred_check
      _
    $region3: #{tpu_custom_call.1} parent=1 // pred_check_branch
      %13 = sbr.rel (0) target = $region5
    $region4: #{tpu_custom_call.1} parent=1 // pred_region
      %s15 = ssub.s32 128, 128
      %16 = vsyncadd [#allocation3], %s15
      %s18 = sshll.u32 [#allocation2], 4
      %s19 = int_to_ptr.vmem [resolvable:$true] %s18
      %21 = dma.hbm_to_vmem [thread:$0]  %s0, 128, %s19, [#allocation3]
    $region5: #{tpu_custom_call.1} parent=1 // pred_fallthru
      _
    // Predicated region
    $region6: #{tpu_custom_call.1} parent=1 // pred_check
      _
    $region7: #{tpu_custom_call.1} parent=1 // pred_check_branch
      %23 = sbr.rel (0) target = $region9
    $region8: #{tpu_custom_call.1} parent=1 // pred_region
      %s25 = ssub.s32 512, 512
      %26 = vsyncadd [#allocation6], %s25
      %s27 = sshll.u32 [#allocation5], 4
      %s28 = int_to_ptr.vmem [resolvable:$true] %s27
      %33 = dma.hbm_to_vmem [thread:$0]  %s1, 512, %s28, [#allocation6], 128, 128, 8
    $region9: #{tpu_custom_call.1} parent=1 // pred_fallthru
      _
    // Predicated region
    $region10: #{tpu_custom_call.1} parent=1 // pred_check
      _
    $region11: #{tpu_custom_call.1} parent=1 // pred_check_branch
      %35 = sbr.rel (0) target = $region13
    $region12: #{tpu_custom_call.1} parent=1 // pred_region
      %s37 = ssub.s32 896, 896
      %38 = vsyncadd [#allocation6], %s37
      %s39 = sshll.u32 [#allocation7], 4
      %s40 = int_to_ptr.vmem [resolvable:$true] %s39
      %45 = dma.hbm_to_vmem [thread:$0]  %s2, 896, %s40, [#allocation6], 128, 128, 8
    $region13: #{tpu_custom_call.1} parent=1 // pred_fallthru
      _
    // Predicated region
    $region14: #{tpu_custom_call.1} parent=1 // pred_check
      _
    $region15: #{tpu_custom_call.1} parent=1 // pred_check_branch
      %47 = sbr.rel (0) target = $region17
    $region16: #{tpu_custom_call.1} parent=1 // pred_region
      _
    $region17: #{tpu_custom_call.1} parent=1 // pred_fallthru
      _
    // Predicated region
    $region18: #{tpu_custom_call.1} parent=1 // pred_check
      _
    $region19: #{tpu_custom_call.1} parent=1 // pred_check_branch
      %49 = sbr.rel (0) target = $region21
    $region20: #{tpu_custom_call.1} parent=1 // pred_region
      %50 = dma.done [#allocation3], 128
    $region21: #{tpu_custom_call.1} parent=1 // pred_fallthru
      _
    // Predicated region
    $region22: #{tpu_custom_call.1} parent=1 // pred_check
      _
    $region23: #{tpu_custom_call.1} parent=1 // pred_check_branch
      %52 = sbr.rel (0) target = $region25
    $region24: #{tpu_custom_call.1} parent=1 // pred_region
      %53 = dma.done [#allocation6], 512
    $region25: #{tpu_custom_call.1} parent=1 // pred_fallthru
      _
    // Predicated region
    $region26: #{tpu_custom_call.1} parent=1 // pred_check
      _
    $region27: #{tpu_custom_call.1} parent=1 // pred_check_branch
      %55 = sbr.rel (0) target = $region29
    $region28: #{tpu_custom_call.1} parent=1 // pred_region
      %56 = dma.done [#allocation6], 896
    $region29: #{tpu_custom_call.1} parent=1 // pred_fallthru
      _
    %v57 = vld [vmem:[#allocation2] sm:$0xff]
    %v58 = vld [vmem:[#allocation5] sm:$0xff]
    %v59 = vld [vmem:[#allocation5 + $0x8] sm:$0xff]
    %v60 = vld [vmem:[#allocation5 + $0x10] sm:$0xff]
    %v61 = vld [vmem:[#allocation5 + $0x18] sm:$0x1]
    %vm62 = vcmask 203776
    %v64 = vsel %vm62, %v57, 0
    %vm66 = vcmask 1040384
    %v68 = vsel %vm66, %v61, 0
    %70 = vmatprep.subr.mxu0 0.0
    %71 = vmatpush1.msra.mxu0 %v58
    %72 = vmatprep.subr.mxu0 0.0
    %73 = vmatpush1.msra.mxu0 %v59
    %74 = vmatprep.subr.mxu0 0.0
    %75 = vmatpush1.msra.mxu0 %v60
    %76 = vmatprep.subr.mxu0 0.0
    %77 = vmatpush1.msra.mxu0 %v68
    %78 = vmatprep.subr.mxu0 0.0
    %79 = vmatpush1.msra.mxu0 0.0
    %80 = vmatprep.subr.mxu0 0.0
    %81 = vmatpush1.msra.mxu0 0.0
    %82 = vmatprep.subr.mxu0 0.0
    %83 = vmatpush1.msra.mxu0 0.0
    %84 = vmatprep.subr.mxu0 0.0
    %85 = vmatpush1.msra.mxu0 0.0
    %86 = vmatprep.subr.mxu0 0.0
    %87 = vmatpush1.msra.mxu0 0.0
    %88 = vmatprep.subr.mxu0 0.0
    %89 = vmatpush1.msra.mxu0 0.0
    %90 = vmatprep.subr.mxu0 0.0
    %91 = vmatpush1.msra.mxu0 0.0
    %92 = vmatprep.subr.mxu0 0.0
    %93 = vmatpush1.msra.mxu0 0.0
    %94 = vmatprep.subr.mxu0 0.0
    %95 = vmatpush1.msra.mxu0 0.0
    %96 = vmatprep.subr.mxu0 0.0
    %97 = vmatpush1.msra.mxu0 0.0
    %98 = vmatprep.subr.mxu0 0.0
    %99 = vmatpush1.msra.mxu0 0.0
    %100 = vmatprep.subr.mxu0 0.0
    %101 = vmatpush1.msra.mxu0 0.0
    %102 = vmatprep.subr.mxu0 0.0
    %103 = vmatpush1.msra.mxu0 0.0
    %104 = vmatprep.subr.mxu0 0.0
    %105 = vmatpush1.msra.mxu0 0.0
    %106 = vmatprep.subr.mxu0 0.0
    %107 = vmatpush1.msra.mxu0 0.0
    %108 = vmatprep.subr.mxu0 0.0
    %109 = vmatpush1.msra.mxu0 0.0
    %110 = vmatprep.subr.mxu0 0.0
    %111 = vmatpush1.msra.mxu0 0.0
    %112 = vmatprep.subr.mxu0 0.0
    %113 = vmatpush1.msra.mxu0 0.0
    %114 = vmatprep.subr.mxu0 0.0
    %115 = vmatpush1.msra.mxu0 0.0
    %116 = vmatprep.subr.mxu0 0.0
    %117 = vmatpush1.msra.mxu0 0.0
    %118 = vmatprep.subr.mxu0 0.0
    %119 = vmatpush1.msra.mxu0 0.0
    %120 = vmatprep.subr.mxu0 0.0
    %121 = vmatpush1.msra.mxu0 0.0
    %122 = vmatprep.subr.mxu0 0.0
    %123 = vmatpush1.msra.mxu0 0.0
    %124 = vmatprep.subr.mxu0 0.0
    %125 = vmatpush1.msra.mxu0 0.0
    %126 = vmatprep.subr.mxu0 0.0
    %127 = vmatpush1.msra.mxu0 0.0
    %128 = vmatprep.subr.mxu0 0.0
    %129 = vmatpush1.msra.mxu0 0.0
    %130 = vmatprep.subr.mxu0 0.0
    %131 = vmatpush1.msra.mxu0 0.0
    %132 = vmatprep.subr.mxu0 0.0
    %133 = vmatpush1.msra.mxu0 0.0
    %134 = vmatprep.mubr.f32.mxu0 0.0
    %135 = vmatmul.mubr.f32.gmra.mrb[0].mxu0 %v64
    %v136 = vpop.f32.mrb[0].mxu0
    %v137 = vadd.f32 0.0, %v136
    %v138 = vpop.f32.mrb[0].mxu0
    %139 = vdwg.mxu0
    %v140 = vld [vmem:[#allocation7] sm:$0xff]
    %v141 = vld [vmem:[#allocation7 + $0x8] sm:$0xff]
    %v142 = vld [vmem:[#allocation7 + $0x10] sm:$0xff]
    %v143 = vld [vmem:[#allocation7 + $0x18] sm:$0xff]
    %v144 = vld [vmem:[#allocation7 + $0x20] sm:$0xff]
    %v145 = vld [vmem:[#allocation7 + $0x28] sm:$0xff]
    %v146 = vld [vmem:[#allocation7 + $0x30] sm:$0x3]
    %v147 = vld [vmem:[%s3] sm:$0x1]
    %v149 = vlaneseq
    %v150 = vshrl.u32 %v149, 7
    %v151 = vsub.s32 0, %v150
    %v152 = vrot.slane %v147, %v151
    %vm154 = vcmask 408576
    %v156 = vsel %vm154, %v137, 0
    %vm158 = vcmask 1041408
    %v160 = vsel %vm158, %v146, 0
    %162 = vmatprep.subr.mxu0 0.0
    %163 = vmatpush1.msra.mxu0 %v140
    %164 = vmatprep.subr.mxu0 0.0
    %165 = vmatpush1.msra.mxu0 %v141
    %166 = vmatprep.subr.mxu0 0.0
    %167 = vmatpush1.msra.mxu0 %v142
    %168 = vmatprep.subr.mxu0 0.0
    %169 = vmatpush1.msra.mxu0 %v143
    %170 = vmatprep.subr.mxu0 0.0
    %171 = vmatpush1.msra.mxu0 %v144
    %172 = vmatprep.subr.mxu0 0.0
    %173 = vmatpush1.msra.mxu0 %v145
    %174 = vmatprep.subr.mxu0 0.0
    %175 = vmatpush1.msra.mxu0 %v160
    %176 = vmatprep.subr.mxu0 0.0
    %177 = vmatpush1.msra.mxu0 0.0
    %178 = vmatprep.subr.mxu0 0.0
    %179 = vmatpush1.msra.mxu0 0.0
    %180 = vmatprep.subr.mxu0 0.0
    %181 = vmatpush1.msra.mxu0 0.0
    %182 = vmatprep.subr.mxu0 0.0
    %183 = vmatpush1.msra.mxu0 0.0
    %184 = vmatprep.subr.mxu0 0.0
    %185 = vmatpush1.msra.mxu0 0.0
    %186 = vmatprep.subr.mxu0 0.0
    %187 = vmatpush1.msra.mxu0 0.0
    %188 = vmatprep.subr.mxu0 0.0
    %189 = vmatpush1.msra.mxu0 0.0
    %190 = vmatprep.subr.mxu0 0.0
    %191 = vmatpush1.msra.mxu0 0.0
    %192 = vmatprep.subr.mxu0 0.0
    %193 = vmatpush1.msra.mxu0 0.0
    %194 = vmatprep.subr.mxu0 0.0
    %195 = vmatpush1.msra.mxu0 0.0
    %196 = vmatprep.subr.mxu0 0.0
    %197 = vmatpush1.msra.mxu0 0.0
    %198 = vmatprep.subr.mxu0 0.0
    %199 = vmatpush1.msra.mxu0 0.0
    %200 = vmatprep.subr.mxu0 0.0
    %201 = vmatpush1.msra.mxu0 0.0
    %202 = vmatprep.subr.mxu0 0.0
    %203 = vmatpush1.msra.mxu0 0.0
    %204 = vmatprep.subr.mxu0 0.0
    %205 = vmatpush1.msra.mxu0 0.0
    %206 = vmatprep.subr.mxu0 0.0
    %207 = vmatpush1.msra.mxu0 0.0
    %208 = vmatprep.subr.mxu0 0.0
    %209 = vmatpush1.msra.mxu0 0.0
    %210 = vmatprep.subr.mxu0 0.0
    %211 = vmatpush1.msra.mxu0 0.0
    %212 = vmatprep.subr.mxu0 0.0
    %213 = vmatpush1.msra.mxu0 0.0
    %214 = vmatprep.subr.mxu0 0.0
    %215 = vmatpush1.msra.mxu0 0.0
    %216 = vmatprep.subr.mxu0 0.0
    %217 = vmatpush1.msra.mxu0 0.0
    %218 = vmatprep.subr.mxu0 0.0
    %219 = vmatpush1.msra.mxu0 0.0
    %220 = vmatprep.subr.mxu0 0.0
    %221 = vmatpush1.msra.mxu0 0.0
    %222 = vmatprep.subr.mxu0 0.0
    %223 = vmatpush1.msra.mxu0 0.0
    %224 = vmatprep.subr.mxu0 0.0
    %225 = vmatpush1.msra.mxu0 0.0
    %226 = vmatprep.mubr.f32.mxu0 0.0
    %227 = vmatmul.mubr.f32.gmra.mrb[0].mxu0 %v156
    %v228 = vpop.f32.mrb[0].mxu0
    %v229 = vadd.f32 %v152, %v228
    %v230 = vpop.f32.mrb[0].mxu0
    %231 = vdwg.mxu0
    %233 = vrot.lane.b32.xlu0 %v229, 50
    %v234 = vpop.permute.xlu0 %233
    %v236 = vsel %vm154, %v137, %v234
    %vm237 = vcmask 818176
    %238 = vst.msk [vmem:[#allocation8] sm:$0xff] %vm237, %v236
    // Predicated region
    $region30: #{tpu_custom_call.1} parent=1 // pred_check
      _
    $region31: #{tpu_custom_call.1} parent=1 // pred_check_branch
      %240 = sbr.rel (0) target = $region33
    $region32: #{tpu_custom_call.1} parent=1 // pred_region
      %s242 = ssub.s32 128, 128
      %243 = vsyncadd [#allocation4], %s242
      %s245 = sshll.u32 [#allocation8], 4
      %s246 = int_to_ptr.vmem [resolvable:$true] %s245
      %248 = dma.vmem_to_hbm [thread:$0]  %s246, 128, %s4, [#allocation4]
    $region33: #{tpu_custom_call.1} parent=1 // pred_fallthru
      _
    // Predicated region
    $region34: #{tpu_custom_call.1} parent=1 // pred_check
      _
    $region35: #{tpu_custom_call.1} parent=1 // pred_check_branch
      %250 = sbr.rel (0) target = $region37
    $region36: #{tpu_custom_call.1} parent=1 // pred_region
      %251 = dma.done [#allocation4], 128
    $region37: #{tpu_custom_call.1} parent=1 // pred_fallthru
      _
    %252 = vsyncpa [#allocation3], 1
    %253 = vsyncpa [#allocation6], 1
    %254 = vsyncpa [#allocation4], 1

</llo_original>
